<compile_context>
chip_gen: v6e
topology: v6e:2x2x1
jax: 0.10.0
libtpu: 0.0.40
codegen_flags: <defaults>
</compile_context>

<pallas_src>
import functools

import jax
import jax.numpy as jnp
from jax.experimental import pallas as pl
from jax.experimental.pallas import tpu as pltpu


def _frame_weight_kernel(cur_ref, dirs_ref, w_ref, *, s_weight):
    # cur_ref:  (1, D)  current frame look direction (flattened)
    # dirs_ref: (N, D)  neighbour look directions (flattened)
    # w_ref:    (N, 1)  output weights
    cur = cur_ref[...]                                     # (1, D)
    dirs = dirs_ref[...]                                   # (N, D)

    # Per-neighbour dot product with the current direction (lane reduce).
    dots = jnp.sum(dirs * cur, axis=-1, keepdims=True)     # (N, 1)

    # exp(s * (dot - 1))  -- s_weight is a Python float folded at trace time.
    exps = jnp.exp(s_weight * (dots - 1.0))                # (N, 1)

    # Subtract the minimum, relu, normalize by the sum (matches the PyTorch
    # module exactly, including the degenerate 0/0 case when all dirs equal).
    exp_min = jnp.min(exps, axis=0, keepdims=True)         # (1, 1)
    unnorm = jnp.maximum(exps - exp_min, 0.0)              # relu
    wsum = jnp.sum(unnorm, axis=0, keepdims=True)          # (1, 1)

    w_ref[...] = unnorm / wsum


def frame_weights(cur_dir, neighbour_dirs, s_weight=1.0):
    """Pallas port of FrameWeightComputer.forward.

    cur_dir:        array of any shape with D total elements (look direction).
    neighbour_dirs: array of shape (N, ...) -- one look direction per close
                    frame (each flattened to D elements).
    Returns weights of shape (N,), float32.
    """
    cur = jnp.asarray(cur_dir, jnp.float32).reshape(1, -1)           # (1, D)
    dirs = jnp.asarray(neighbour_dirs, jnp.float32)
    n = dirs.shape[0]
    dirs = dirs.reshape(n, -1)                                       # (N, D)
    d = dirs.shape[1]
    if cur.shape[1] != d:
        raise ValueError("cur_dir and neighbour_dirs dimensionality mismatch")

    kernel = functools.partial(_frame_weight_kernel, s_weight=float(s_weight))

    # Tiny, memory-trivial op: tell XLA it is cheap.
    cost = pl.CostEstimate(
        flops=3 * n * d + 6 * n,
        transcendentals=n,
        bytes_accessed=4 * (d + n * d + n),
    )

    out = pl.pallas_call(
        kernel,
        out_shape=jax.ShapeDtypeStruct((n, 1), jnp.float32),
        grid=(1,),
        in_specs=[
            pl.BlockSpec((1, d), lambda i: (0, 0)),   # whole cur_dir block
            pl.BlockSpec((n, d), lambda i: (0, 0)),   # whole neighbour block
        ],
        out_specs=pl.BlockSpec((n, 1), lambda i: (0, 0)),
        compiler_params=pltpu.CompilerParams(
            dimension_semantics=("arbitrary",),
        ),
        cost_estimate=cost,
    )(cur, dirs)
    return out.reshape(n)


def _reference(cur_dir, neighbour_dirs, s_weight=1.0):
    cur = jnp.asarray(cur_dir, jnp.float32).reshape(-1)
    dirs = jnp.asarray(neighbour_dirs, jnp.float32)
    dirs = dirs.reshape(dirs.shape[0], -1)
    dots = dirs @ cur
    exps = jnp.exp(s_weight * (dots - 1.0))
    exp_min = exps.min()
    unnorm = jnp.maximum(exps - exp_min, 0.0)
    return unnorm / unnorm.sum()


if __name__ == "__main__":
    key = jax.random.PRNGKey(0)
    k1, k2 = jax.random.split(key)

    n_neighbours, dim = 8, 3
    # Unit-norm look directions, like camera frames in the original module.
    cur_dir = jax.random.normal(k1, (dim,), dtype=jnp.float32)
    cur_dir = cur_dir / jnp.linalg.norm(cur_dir)
    neighbour_dirs = jax.random.normal(k2, (n_neighbours, dim), dtype=jnp.float32)
    neighbour_dirs = neighbour_dirs / jnp.linalg.norm(
        neighbour_dirs, axis=-1, keepdims=True
    )

    w = frame_weights(cur_dir, neighbour_dirs, s_weight=1.0)
    w = jax.block_until_ready(w)

    w_ref = _reference(cur_dir, neighbour_dirs, s_weight=1.0)
    assert w.shape == (n_neighbours,), w.shape
    assert jnp.allclose(w, w_ref, atol=1e-5, rtol=1e-5), (w, w_ref)
    # Weights should sum to 1 (same as the PyTorch module's output).
    assert jnp.allclose(jnp.sum(w), 1.0, atol=1e-5)

    print("KERNEL_OK")
</pallas_src>

<mosaic_0001>
module attributes {stable_mosaic.version = 11 : i64} {
  func.func @_frame_weight_kernel(%arg0: i32, %arg1: memref<1x3xf32, #tpu.memory_space<vmem>>, %arg2: memref<8x3xf32, #tpu.memory_space<vmem>>, %arg3: memref<8x1xf32, #tpu.memory_space<vmem>>) attributes {dimension_semantics = [#tpu.dimension_semantics<arbitrary>], iteration_bounds = array<i64: 1>, scalar_prefetch = 0 : i64, scratch_operands = 0 : i64, tpu.core_type = #tpu.core_type<tc>, window_params = [{pipeline_mode = #tpu.pipeline_mode<synchronous>, transform_indices = @transform_0, window_bounds = array<i64: 1, 3>}, {pipeline_mode = #tpu.pipeline_mode<synchronous>, transform_indices = @transform_1, window_bounds = array<i64: 8, 3>}, {pipeline_mode = #tpu.pipeline_mode<synchronous>, transform_indices = @transform_2, window_bounds = array<i64: 8, 1>}]} {
    %c0 = arith.constant 0 : index
    %c0_0 = arith.constant 0 : index
    %0 = vector.load %arg1[%c0, %c0_0] : memref<1x3xf32, #tpu.memory_space<vmem>>, vector<1x3xf32>
    %c0_1 = arith.constant 0 : index
    %c0_2 = arith.constant 0 : index
    %1 = vector.load %arg2[%c0_1, %c0_2] : memref<8x3xf32, #tpu.memory_space<vmem>>, vector<8x3xf32>
    %2 = vector.broadcast %0 : vector<1x3xf32> to vector<8x3xf32>
    %3 = arith.mulf %1, %2 : vector<8x3xf32>
    %cst = arith.constant dense<0.000000e+00> : vector<8xf32>
    %4 = vector.multi_reduction <add>, %3, %cst [1] : vector<8x3xf32> to vector<8xf32>
    %5 = vector.shape_cast %4 : vector<8xf32> to vector<8x1xf32>
    %cst_3 = arith.constant 1.000000e+00 : f32
    %6 = vector.broadcast %cst_3 : f32 to vector<8x1xf32>
    %7 = arith.subf %5, %6 : vector<8x1xf32>
    %cst_4 = arith.constant 1.000000e+00 : f32
    %8 = vector.broadcast %cst_4 : f32 to vector<8x1xf32>
    %9 = arith.mulf %8, %7 : vector<8x1xf32>
    %10 = math.exp %9 : vector<8x1xf32>
    %cst_5 = arith.constant dense<0x7F800000> : vector<1xf32>
    %11 = vector.multi_reduction <minimumf>, %10, %cst_5 [0] : vector<8x1xf32> to vector<1xf32>
    %12 = vector.shape_cast %11 : vector<1xf32> to vector<1x1xf32>
    %13 = vector.broadcast %12 : vector<1x1xf32> to vector<8x1xf32>
    %14 = arith.subf %10, %13 : vector<8x1xf32>
    %cst_6 = arith.constant 0.000000e+00 : f32
    %15 = vector.broadcast %cst_6 : f32 to vector<8x1xf32>
    %16 = arith.maximumf %14, %15 : vector<8x1xf32>
    %cst_7 = arith.constant dense<0.000000e+00> : vector<1xf32>
    %17 = vector.multi_reduction <add>, %16, %cst_7 [0] : vector<8x1xf32> to vector<1xf32>
    %18 = vector.shape_cast %17 : vector<1xf32> to vector<1x1xf32>
    %19 = vector.broadcast %18 : vector<1x1xf32> to vector<8x1xf32>
    %20 = arith.divf %16, %19 : vector<8x1xf32>
    %c0_8 = arith.constant 0 : index
    %c0_9 = arith.constant 0 : index
    %21 = vector.load %arg3[%c0_8, %c0_9] : memref<8x1xf32, #tpu.memory_space<vmem>>, vector<8x1xf32>
    tpu.vector_store %arg3[%c0_8, %c0_9], %20 {strides = array<i32>} : memref<8x1xf32, #tpu.memory_space<vmem>>, vector<8x1xf32>,
    return
  }
  func.func @transform_0(%arg0: i32) -> (i32, i32) {
    %c0_i32 = arith.constant 0 : i32
    %c0_i32_0 = arith.constant 0 : i32
    %c0_i32_1 = arith.constant 0 : i32
    return %c0_i32, %c0_i32_0 : i32, i32
  }
  func.func @transform_1(%arg0: i32) -> (i32, i32) {
    %c0_i32 = arith.constant 0 : i32
    %c0_i32_0 = arith.constant 0 : i32
    %c0_i32_1 = arith.constant 0 : i32
    return %c0_i32, %c0_i32_0 : i32, i32
  }
  func.func @transform_2(%arg0: i32) -> (i32, i32) {
    %c0_i32 = arith.constant 0 : i32
    %c0_i32_0 = arith.constant 0 : i32
    %c0_i32_1 = arith.constant 0 : i32
    return %c0_i32, %c0_i32_0 : i32, i32
  }
}

</mosaic_0001>

<llo_original>
// kernel: tpu_custom_call.1
$region0: #{tpu_custom_call.1}
  #allocation0 [shape = 'u32[]', space=smem, size = 0x4, offset = 0x4, fixed_abs, tag = 'smem constant byte address 0x4 - core index']
  #allocation1 [shape = 'u32[144,128]{1,0:T(1,128)}', space=vmem, size = 0x12000, scoped, tag = 'internal scratch']
  %s0 = inlined_call_operand.vmem [shape: f32[1,3], index: 0, kind: input, shape index: {}]
  %s1 = inlined_call_operand.vmem [shape: f32[8,3], index: 1, kind: input, shape index: {}]
  %s2 = inlined_call_operand.vmem [shape: f32[8,1], index: 2, kind: output, shape index: {}]
  %s3 = sld [smem:[#allocation0]]
  $region18: #{tpu_custom_call.1} parent=0
    _
  %s5 = ssub.s32 1, %s3
  %s6 = scalar_select 0, %s5, %s3
  // Predicated region
  $region2: #{tpu_custom_call.1} parent=0 // pred_check
    _
  $region3: #{tpu_custom_call.1} parent=0 // pred_check_branch
    %8 = sbr.rel (0) target = $region5
  $region4: #{tpu_custom_call.1} parent=0 // pred_region
    _
  $region5: #{tpu_custom_call.1} parent=0 // pred_fallthru
    _
  // Predicated region
  $region6: #{tpu_custom_call.1} parent=0 // pred_check
    _
  $region7: #{tpu_custom_call.1} parent=0 // pred_check_branch
    %10 = sbr.rel (0) target = $region9
  $region8: #{tpu_custom_call.1} parent=0 // pred_region
    _
  $region9: #{tpu_custom_call.1} parent=0 // pred_fallthru
    _
  %v11 = vld [vmem:[%s0] sm:$0x1]
  %v12 = vld [vmem:[%s1] sm:$0xff]
  %v14 = vlaneseq
  %v15 = vshrl.u32 %v14, 7
  %v16 = vsub.s32 0, %v15
  %v17 = vrot.slane %v11, %v16
  %v19 = vmul.f32 %v12, %v17
  %vm20 = vcmask 23552
  %v21 = vsel %vm20, %v19, 0.0
  %22 = vadd.xlane.f32.xlu0 %v21
  %v23 = vpop.xlane.xlu0 %22
  %v24 = vsub.f32 %v23, 1.0
  %v25 = vmul.f32 %v24, 1.442695
  %v26 = vpow.pop %v25
  %v27 = vrot.slane %v26, 4
  %v28 = vmin.f32 %v26, %v27
  %v29 = vrot.slane %v28, 2
  %v30 = vmin.f32 %v28, %v29
  %v31 = vrot.slane %v30, 1
  %v32 = vmin.f32 %v30, %v31
  %v33 = vsub.f32 %v26, %v32
  %v34 = vmax.f32 %v33, 0.0
  %v35 = vrot.slane %v34, 4
  %v36 = vadd.f32 %v34, %v35
  %v37 = vrot.slane %v36, 2
  %v38 = vadd.f32 %v36, %v37
  %v39 = vrot.slane %v38, 1
  %v40 = vadd.f32 %v38, %v39
  %v41 = vrcp.pop %v40
  %v42 = vmul.f32 %v34, %v41
  %vm43 = vcmask 7168
  %44 = vst.msk [vmem:[%s2] sm:$0xff] %vm43, %v42
  // Predicated region
  $region10: #{tpu_custom_call.1} parent=0 // pred_check
    _
  $region11: #{tpu_custom_call.1} parent=0 // pred_check_branch
    %46 = sbr.rel (0) target = $region13
  $region12: #{tpu_custom_call.1} parent=0 // pred_region
    _
  $region13: #{tpu_custom_call.1} parent=0 // pred_fallthru
    _
  // Predicated region
  $region14: #{tpu_custom_call.1} parent=0 // pred_check
    _
  $region15: #{tpu_custom_call.1} parent=0 // pred_check_branch
    %48 = sbr.rel (0) target = $region17
  $region16: #{tpu_custom_call.1} parent=0 // pred_region
    _
  $region17: #{tpu_custom_call.1} parent=0 // pred_fallthru
    _

</llo_original>
